<compile_context>
chip_gen: v6e
topology: v6e:2x2x1
jax: 0.10.0
libtpu: 0.0.40
codegen_flags: <defaults>
</compile_context>

<pallas_src>
import jax
import jax.numpy as jnp
from jax.experimental import pallas as pl
from jax.experimental.pallas import tpu as pltpu
import numpy as np

KERNEL_SIZES = (2, 3, 4, 5, 6, 7)
FILTER_NUMS = (3, 3, 3, 2, 2, 1)
SUM_FILTERS = sum(FILTER_NUMS)   # 14
KMAX = max(KERNEL_SIZES)         # 7
KMIN = min(KERNEL_SIZES)         # 2
F_PAD = 128                      # padded filter (lane) axis

# Model hyper-params (small, consistent with the module's forward)
TCR_NUM = 8       # tcr_num (MIL bag size); module default 100, kept small here
AA_NUM = 24       # aa_num  (sequence length)
FEATURE_NUM = 15  # feature_num (Conv1d in_channels)
BATCH = 2


def _round_up(n, m):
    return ((n + m - 1) // m) * m


def deeplion_kernel(patches_ref,   # (1, T_pad*LP_pad, K_pad)  im2col patches for this bag
                    wconv_ref,     # (K_pad, F_PAD)            packed conv weights
                    rows_ref,      # (8, F_PAD)                packed small params
                    wmilT_ref,     # (T_pad, F_PAD)            mil_fc weight, transposed+padded
                    out_ref):      # (1, 8, F_PAD)             lane-dense output block
    _, RPB, _ = patches_ref.shape
    TP = wmilT_ref.shape[0]
    LPP = RPB // TP
    FP = wconv_ref.shape[1]

    rows = rows_ref[...]
    bias_row = rows[0:1, :]        # Conv1d biases per filter lane (zeros past 14)
    wcnn_row = rows[1:2, :]        # cnn_fc (Linear(14,1)) weight per filter lane
    lout_row = rows[2:3, :]        # valid conv-output length per filter lane
    bmil_row = rows[3:4, :]        # mil_fc bias in lanes 0..1
    bcnn = rows[4:5, 0:1]          # cnn_fc bias, (1, 1)

    # One MXU matmul retires the entire multi-kernel-size conv stack.
    y = jnp.dot(patches_ref[0], wconv_ref[...],
                preferred_element_type=jnp.float32)          # (RPB, FP)
    y = y.reshape(TP, LPP, FP)                               # (T_pad, LP_pad, FP)

    # Conv1d bias + ReLU.
    act = jnp.maximum(y + bias_row, 0.0)                     # (T_pad, LP_pad, FP)

    # Mask ragged positions (p >= Lout for this filter's kernel size); ReLU >= 0 so
    # zero-filled invalid positions never win the max.
    pos = jax.lax.broadcasted_iota(jnp.int32, (LPP, FP), 0).astype(jnp.float32)
    valid = (pos < lout_row).astype(jnp.float32)             # (LP_pad, FP)
    pooled = jnp.max(act * valid[None, :, :], axis=1)        # (T_pad, FP)  AdaptiveMaxPool1d(1)

    # cnn_fc Linear(14,1): per-TCR score (dropout = identity in eval).
    cnn = jnp.sum(pooled * wcnn_row, axis=-1, keepdims=True) + bcnn   # (T_pad, 1)

    # mil_fc Linear(T,2): weighted sublane reduce; padded TCR rows of wmilT are zero.
    res = jnp.sum(cnn * wmilT_ref[...], axis=0, keepdims=True) + bmil_row   # (1, FP)

    out_ref[0] = jnp.broadcast_to(res, out_ref.shape[1:])    # dense (8, 128) store


def prepare_params(params, tcr_num, aa_num, feature_num):
    """Pack all parameters once (not per forward call) into padded VMEM arrays."""
    C, L = feature_num, aa_num
    T_pad = _round_up(tcr_num, 8)
    LP = L - KMIN + 1                        # max conv-output length (kernel size 2)
    LP_pad = _round_up(LP, 8)
    K_pad = _round_up(KMAX * C, 128)         # padded contraction dim (105 -> 128)

    wconv = np.zeros((K_pad, F_PAD), np.float32)
    bias_row = np.zeros((F_PAD,), np.float32)
    wcnn_row = np.zeros((F_PAD,), np.float32)
    lout_row = np.zeros((F_PAD,), np.float32)

    off = 0
    for g, h in enumerate(KERNEL_SIZES):
        Fg = FILTER_NUMS[g]
        W = np.asarray(params["conv_w"][g], np.float32)      # (Fg, C, h) PyTorch layout
        b = np.asarray(params["conv_b"][g], np.float32)      # (Fg,)
        for f in range(Fg):
            for k in range(h):
                wconv[k * C:(k + 1) * C, off + f] = W[f, :, k]
            bias_row[off + f] = b[f]
            lout_row[off + f] = float(L - h + 1)
        off += Fg

    wcnn_row[:SUM_FILTERS] = np.asarray(params["wcnn"], np.float32).reshape(-1)

    rows = np.zeros((8, F_PAD), np.float32)
    rows[0] = bias_row
    rows[1] = wcnn_row
    rows[2] = lout_row
    rows[3, :2] = np.asarray(params["bmil"], np.float32).reshape(-1)
    rows[4, 0] = float(np.asarray(params["bcnn"], np.float32).reshape(-1)[0])

    wmilT = np.zeros((T_pad, F_PAD), np.float32)
    wmilT[:tcr_num, :2] = np.asarray(params["wmil"], np.float32).T   # (T, 2)

    return {
        "wconv": jnp.asarray(wconv),
        "rows": jnp.asarray(rows),
        "wmilT": jnp.asarray(wmilT),
        "T_pad": T_pad,
        "LP_pad": LP_pad,
        "K_pad": K_pad,
    }


def deeplion_forward(x, packed):
    """x: (B, tcr_num, feature_num, aa_num) float32, mirrors the PyTorch input."""
    B, T, C, L = x.shape
    T_pad, LP_pad, K_pad = packed["T_pad"], packed["LP_pad"], packed["K_pad"]
    F_pad = packed["wconv"].shape[1]
    RPB = T_pad * LP_pad

    # Wrapper-side im2col: (B, T_pad, LP_pad, KMAX*C) zero-padded patches, lane dim -> 128.
    x_ltc = jnp.transpose(x, (0, 1, 3, 2)).astype(jnp.float32)          # (B, T, L, C)
    if T_pad > T:
        x_ltc = jnp.pad(x_ltc, ((0, 0), (0, T_pad - T), (0, 0), (0, 0)))
    pad_L = LP_pad + KMAX - 1 - L
    x_ltc = jnp.pad(x_ltc, ((0, 0), (0, 0), (0, pad_L), (0, 0)))        # (B, T_pad, L+pad, C)
    windows = [x_ltc[:, :, k:k + LP_pad, :] for k in range(KMAX)]
    patches = jnp.stack(windows, axis=3)                                # (B, T_pad, LP_pad, KMAX, C)
    patches = patches.reshape(B, RPB, KMAX * C)
    patches = jnp.pad(patches, ((0, 0), (0, 0), (0, K_pad - KMAX * C)))  # (B, RPB, K_pad)

    out = pl.pallas_call(
        deeplion_kernel,
        out_shape=jax.ShapeDtypeStruct((B, 8, F_pad), jnp.float32),
        grid=(B,),
        in_specs=[
            pl.BlockSpec((1, RPB, K_pad), lambda b: (b, 0, 0)),
            pl.BlockSpec((K_pad, F_pad), lambda b: (0, 0)),
            pl.BlockSpec((8, F_pad), lambda b: (0, 0)),
            pl.BlockSpec((T_pad, F_pad), lambda b: (0, 0)),
        ],
        out_specs=pl.BlockSpec((1, 8, F_pad), lambda b: (b, 0, 0)),
        compiler_params=pltpu.CompilerParams(dimension_semantics=("parallel",)),
    )(patches, packed["wconv"], packed["rows"], packed["wmilT"])

    return out[:, 0, :2]                                                # (B, 2)


def deeplion_ref(x, params):
    """Pure-JAX reference reproducing the PyTorch forward (eval mode)."""
    B, T, C, L = x.shape
    xf = x.reshape(B * T, C, L).astype(jnp.float32)
    pooled = []
    for g, h in enumerate(KERNEL_SIZES):
        W = params["conv_w"][g]          # (F, C, h) PyTorch Conv1d layout
        b = params["conv_b"][g]          # (F,)
        y = jax.lax.conv_general_dilated(
            xf, W, window_strides=(1,), padding="VALID",
            dimension_numbers=("NCH", "OIH", "NCH"),
            precision=jax.lax.Precision.HIGHEST)
        y = jnp.maximum(y + b[None, :, None], 0.0)
        pooled.append(jnp.max(y, axis=-1))                              # (N, F)
    pooled = jnp.concatenate(pooled, axis=1)                            # (N, 14)
    cnn = jnp.dot(pooled, params["wcnn"].T,
                  precision=jax.lax.Precision.HIGHEST) + params["bcnn"]  # (N, 1)
    cnn = cnn.reshape(B, T)
    return jnp.dot(cnn, params["wmil"].T,
                   precision=jax.lax.Precision.HIGHEST) + params["bmil"]  # (B, 2)


def init_params(key):
    keys = jax.random.split(key, 2 * len(KERNEL_SIZES) + 4)
    conv_w, conv_b = [], []
    for g, h in enumerate(KERNEL_SIZES):
        Fg = FILTER_NUMS[g]
        conv_w.append(0.1 * jax.random.normal(keys[2 * g], (Fg, FEATURE_NUM, h), jnp.float32))
        conv_b.append(0.1 * jax.random.normal(keys[2 * g + 1], (Fg,), jnp.float32))
    k0 = 2 * len(KERNEL_SIZES)
    return {
        "conv_w": conv_w,
        "conv_b": conv_b,
        "wcnn": 0.1 * jax.random.normal(keys[k0 + 0], (1, SUM_FILTERS), jnp.float32),
        "bcnn": 0.1 * jax.random.normal(keys[k0 + 1], (1,), jnp.float32),
        "wmil": 0.1 * jax.random.normal(keys[k0 + 2], (2, TCR_NUM), jnp.float32),
        "bmil": 0.1 * jax.random.normal(keys[k0 + 3], (2,), jnp.float32),
    }


if __name__ == "__main__":
    key = jax.random.PRNGKey(0)
    pkey, xkey = jax.random.split(key)
    params = init_params(pkey)
    packed = prepare_params(params, TCR_NUM, AA_NUM, FEATURE_NUM)
    x = jax.random.normal(xkey, (BATCH, TCR_NUM, FEATURE_NUM, AA_NUM), jnp.float32)

    out = jax.block_until_ready(deeplion_forward(x, packed))
    ref = jax.block_until_ready(deeplion_ref(x, params))
    np.testing.assert_allclose(np.asarray(out), np.asarray(ref), rtol=5e-3, atol=5e-3)

    print("KERNEL_OK")
</pallas_src>

<mosaic_0001>
module attributes {stable_mosaic.version = 11 : i64} {
  func.func @deeplion_kernel(%arg0: i32, %arg1: memref<1x192x128xf32, #tpu.memory_space<vmem>>, %arg2: memref<128x128xf32, #tpu.memory_space<vmem>>, %arg3: memref<8x128xf32, #tpu.memory_space<vmem>>, %arg4: memref<8x128xf32, #tpu.memory_space<vmem>>, %arg5: memref<1x8x128xf32, #tpu.memory_space<vmem>>) attributes {dimension_semantics = [#tpu.dimension_semantics<parallel>], iteration_bounds = array<i64: 2>, scalar_prefetch = 0 : i64, scratch_operands = 0 : i64, tpu.core_type = #tpu.core_type<tc>, window_params = [{transform_indices = @transform_0, window_bounds = array<i64: 1, 192, 128>}, {pipeline_mode = #tpu.pipeline_mode<synchronous>, transform_indices = @transform_1, window_bounds = array<i64: 128, 128>}, {pipeline_mode = #tpu.pipeline_mode<synchronous>, transform_indices = @transform_2, window_bounds = array<i64: 8, 128>}, {pipeline_mode = #tpu.pipeline_mode<synchronous>, transform_indices = @transform_3, window_bounds = array<i64: 8, 128>}, {transform_indices = @transform_4, window_bounds = array<i64: 1, 8, 128>}]} {
    %c0 = arith.constant 0 : index
    %c0_0 = arith.constant 0 : index
    %0 = vector.load %arg3[%c0, %c0_0] : memref<8x128xf32, #tpu.memory_space<vmem>>, vector<8x128xf32>
    %1 = vector.extract_strided_slice %0 {offsets = [0, 0], sizes = [1, 128], strides = [1, 1]} : vector<8x128xf32> to vector<1x128xf32>
    %2 = vector.extract_strided_slice %0 {offsets = [1, 0], sizes = [1, 128], strides = [1, 1]} : vector<8x128xf32> to vector<1x128xf32>
    %3 = vector.extract_strided_slice %0 {offsets = [2, 0], sizes = [1, 128], strides = [1, 1]} : vector<8x128xf32> to vector<1x128xf32>
    %4 = vector.extract_strided_slice %0 {offsets = [3, 0], sizes = [1, 128], strides = [1, 1]} : vector<8x128xf32> to vector<1x128xf32>
    %5 = vector.extract_strided_slice %0 {offsets = [4, 0], sizes = [1, 1], strides = [1, 1]} : vector<8x128xf32> to vector<1x1xf32>
    %c0_1 = arith.constant 0 : index
    %c0_2 = arith.constant 0 : index
    %c0_3 = arith.constant 0 : index
    %6 = vector.load %arg1[%c0_1, %c0_2, %c0_3] : memref<1x192x128xf32, #tpu.memory_space<vmem>>, vector<1x192x128xf32>
    %7 = vector.shape_cast %6 : vector<1x192x128xf32> to vector<192x128xf32>
    %c0_4 = arith.constant 0 : index
    %c0_5 = arith.constant 0 : index
    %8 = vector.load %arg2[%c0_4, %c0_5] : memref<128x128xf32, #tpu.memory_space<vmem>>, vector<128x128xf32>
    %cst = arith.constant dense<0.000000e+00> : vector<192x128xf32>
    %9 = tpu.matmul %7, %8, %cst {dimension_numbers = #tpu.dot_dimension_numbers<[1], [0], [0], [1], [0, 0, 1, 1], [], []>} : vector<192x128xf32>, vector<128x128xf32>, vector<192x128xf32> -> vector<192x128xf32>
    %10 = vector.shape_cast %9 : vector<192x128xf32> to vector<8x24x128xf32>
    %11 = vector.shape_cast %1 : vector<1x128xf32> to vector<1x1x128xf32>
    %12 = vector.broadcast %11 : vector<1x1x128xf32> to vector<8x24x128xf32>
    %13 = arith.addf %10, %12 : vector<8x24x128xf32>
    %cst_6 = arith.constant 0.000000e+00 : f32
    %14 = vector.broadcast %cst_6 : f32 to vector<8x24x128xf32>
    %15 = arith.maximumf %13, %14 : vector<8x24x128xf32>
    %16 = tpu.iota {dimensions = array<i32: 0>} : vector<24x128xi32>
    %17 = arith.sitofp %16 : vector<24x128xi32> to vector<24x128xf32>
    %18 = vector.broadcast %3 : vector<1x128xf32> to vector<24x128xf32>
    %19 = arith.cmpf olt, %17, %18 : vector<24x128xf32>
    %20 = arith.extui %19 : vector<24x128xi1> to vector<24x128xi32>
    %21 = arith.sitofp %20 : vector<24x128xi32> to vector<24x128xf32>
    %22 = vector.shape_cast %21 : vector<24x128xf32> to vector<1x24x128xf32>
    %23 = vector.broadcast %22 : vector<1x24x128xf32> to vector<8x24x128xf32>
    %24 = arith.mulf %15, %23 : vector<8x24x128xf32>
    %cst_7 = arith.constant dense<0xFF800000> : vector<8x128xf32>
    %25 = vector.multi_reduction <maximumf>, %24, %cst_7 [1] : vector<8x24x128xf32> to vector<8x128xf32>
    %26 = vector.broadcast %2 : vector<1x128xf32> to vector<8x128xf32>
    %27 = arith.mulf %25, %26 : vector<8x128xf32>
    %cst_8 = arith.constant dense<0.000000e+00> : vector<8xf32>
    %28 = vector.multi_reduction <add>, %27, %cst_8 [1] : vector<8x128xf32> to vector<8xf32>
    %29 = vector.shape_cast %28 : vector<8xf32> to vector<8x1xf32>
    %30 = vector.broadcast %5 : vector<1x1xf32> to vector<8x1xf32>
    %31 = arith.addf %29, %30 : vector<8x1xf32>
    %c0_9 = arith.constant 0 : index
    %c0_10 = arith.constant 0 : index
    %32 = vector.load %arg4[%c0_9, %c0_10] : memref<8x128xf32, #tpu.memory_space<vmem>>, vector<8x128xf32>
    %33 = vector.broadcast %31 : vector<8x1xf32> to vector<8x128xf32>
    %34 = arith.mulf %33, %32 : vector<8x128xf32>
    %cst_11 = arith.constant dense<0.000000e+00> : vector<128xf32>
    %35 = vector.multi_reduction <add>, %34, %cst_11 [0] : vector<8x128xf32> to vector<128xf32>
    %36 = vector.shape_cast %35 : vector<128xf32> to vector<1x128xf32>
    %37 = arith.addf %36, %4 : vector<1x128xf32>
    %38 = vector.shape_cast %37 : vector<1x128xf32> to vector<1x128xf32>
    %39 = vector.broadcast %38 : vector<1x128xf32> to vector<8x128xf32>
    %c0_12 = arith.constant 0 : index
    %c0_13 = arith.constant 0 : index
    %c0_14 = arith.constant 0 : index
    %40 = vector.load %arg5[%c0_12, %c0_13, %c0_14] : memref<1x8x128xf32, #tpu.memory_space<vmem>>, vector<1x8x128xf32>
    %41 = vector.shape_cast %40 : vector<1x8x128xf32> to vector<8x128xf32>
    %42 = vector.shape_cast %39 : vector<8x128xf32> to vector<1x8x128xf32>
    tpu.vector_store %arg5[%c0_12, %c0_13, %c0_14], %42 {strides = array<i32>} : memref<1x8x128xf32, #tpu.memory_space<vmem>>, vector<1x8x128xf32>,
    return
  }
  func.func @transform_0(%arg0: i32) -> (i32, i32, i32) {
    %c0_i32 = arith.constant 0 : i32
    %c0_i32_0 = arith.constant 0 : i32
    %c0_i32_1 = arith.constant 0 : i32
    return %arg0, %c0_i32, %c0_i32_0 : i32, i32, i32
  }
  func.func @transform_1(%arg0: i32) -> (i32, i32) {
    %c0_i32 = arith.constant 0 : i32
    %c0_i32_0 = arith.constant 0 : i32
    %c0_i32_1 = arith.constant 0 : i32
    return %c0_i32, %c0_i32_0 : i32, i32
  }
  func.func @transform_2(%arg0: i32) -> (i32, i32) {
    %c0_i32 = arith.constant 0 : i32
    %c0_i32_0 = arith.constant 0 : i32
    %c0_i32_1 = arith.constant 0 : i32
    return %c0_i32, %c0_i32_0 : i32, i32
  }
  func.func @transform_3(%arg0: i32) -> (i32, i32) {
    %c0_i32 = arith.constant 0 : i32
    %c0_i32_0 = arith.constant 0 : i32
    %c0_i32_1 = arith.constant 0 : i32
    return %c0_i32, %c0_i32_0 : i32, i32
  }
  func.func @transform_4(%arg0: i32) -> (i32, i32, i32) {
    %c0_i32 = arith.constant 0 : i32
    %c0_i32_0 = arith.constant 0 : i32
    %c0_i32_1 = arith.constant 0 : i32
    return %arg0, %c0_i32, %c0_i32_0 : i32, i32, i32
  }
}

</mosaic_0001>

<llo_original>
// kernel: tpu_custom_call.1
$region0: #{tpu_custom_call.1}
  #allocation0 [shape = 'u32[]', space=smem, size = 0x4, offset = 0x4, fixed_abs, tag = 'smem constant byte address 0x4 - core index']
  #allocation1 [shape = 'u32[144,128]{1,0:T(1,128)}', space=vmem, size = 0x12000, scoped, tag = 'internal scratch']
  %s0 = inlined_call_operand.hbm [shape: f32[2,192,128], index: 0, kind: input, shape index: {}]
  %s1 = inlined_call_operand.hbm [shape: f32[128,128], index: 1, kind: input, shape index: {}]
  %s2 = inlined_call_operand.hbm [shape: f32[8,128], index: 2, kind: input, shape index: {}]
  %s3 = inlined_call_operand.hbm [shape: f32[8,128], index: 3, kind: input, shape index: {}]
  %s4 = inlined_call_operand.hbm [shape: f32[2,8,128], index: 4, kind: output, shape index: {}]
  %s5 = sld [smem:[#allocation0]]
  $region65: #{tpu_custom_call.1} parent=0
    _
  %s7 = ssub.s32 1, %s5
  %s8 = scalar_select 0, %s7, %s5
  $region1: #{tpu_custom_call.1} parent=0
    #allocation2 [shape = 'u8[196608]{0}', space=vmem, size = 0x30000, scoped, tag = 'input window, operand 0']
    #allocation3 [shape = 's32[2]{0}', space=sflag, size = 0x8, scoped, tag = 'scoped memory for tpu_custom_call.1']
    #allocation4 [shape = 's32[2]{0}', space=sflag, size = 0x8, scoped, tag = 'scoped memory for tpu_custom_call.1']
    #allocation5 [shape = 'u8[65536]{0}', space=vmem, size = 0x10000, scoped, tag = 'input window, operand 1, single buffered']
    #allocation6 [shape = 's32[1]{0}', space=sflag, size = 0x4, scoped, tag = 'scoped memory for tpu_custom_call.1']
    #allocation7 [shape = 'u8[4096]{0}', space=vmem, size = 0x1000, scoped, tag = 'input window, operand 2, single buffered']
    #allocation8 [shape = 'u8[4096]{0}', space=vmem, size = 0x1000, scoped, tag = 'input window, operand 3, single buffered']
    #allocation9 [shape = 's32[1]{0}', space=sflag, size = 0x4, scoped, tag = 'scoped memory for tpu_custom_call.1']
    #allocation10 [shape = 'u8[8192]{0}', space=vmem, size = 0x2000, scoped, tag = 'output window, operand 0']
    %9 = vsyncpa [#allocation3], 0
    %s10 = scalar_lea.sflag [#allocation3], 1
    %11 = vsyncpa %s10, 0
    %12 = vsyncpa [#allocation6], 0
    %13 = vsyncpa [#allocation9], 0
    %14 = vsyncpa [#allocation4], 0
    %s15 = scalar_lea.sflag [#allocation4], 1
    %16 = vsyncpa %s15, 0
    loop: start=0, step=1, limit=4
    $region2: #{tpu_custom_call.1} parent=1 // loop_pre_header
      _
    $region3: #{tpu_custom_call.1} parent=1 // loop_header
      %s18 = sphi 0, %s22
      %p19 = scmp.ge.s32.totalorder %s18, 4
      %s28 = sphi 0, %s30
      %s31 = sphi 0, %s28
      %s32 = sphi 0, %s31
      %s48 = sphi 0, %s32
      %s52 = sphi 0, %s52
      %s54 = sphi 0, %s52
      %s55 = sphi 0, %s54
      %s69 = sphi 0, %s55
      %s73 = sphi 0, %s73
      %s75 = sphi 0, %s73
      %s76 = sphi 0, %s75
      %s90 = sphi 0, %s76
      %s94 = sphi 0, %s94
      %s96 = sphi 0, %s94
      %s97 = sphi 0, %s96
      %s111 = sphi 0, %s97
      %s117 = sphi 0, %s119
      %s120 = sphi 0, %s117
      %s121 = sphi 0, %s120
      %s137 = sphi 0, %s121
    $region4: #{tpu_custom_call.1} parent=1 // loop_header_branch
      %21 = sbr.rel (%p19) target = $region8
    $region5: #{tpu_custom_call.1} parent=1 // loop_body
      %s23 = ssub.s32 %s18, 1
      %s24 = ssub.s32 %s18, 2
      %s25 = sadd.s32 %s18, 1
      %s26 = ssub.s32 %s18, %s25
      %p27 = scmp.eq.s32.totalorder %s26, 0
      %s29 = sadd.s32 %s28, 1
      %s30 = scalar_select %p27, %s28, %s29
      %p33 = pneg %p27
      %p34 = scmp.eq.s32.totalorder %s18, 1
      %p35 = por %p33, %p34
      %p36 = scmp.ne.s32.totalorder %s28, %s31
      %p37 = scmp.eq.s32.totalorder %s18, 0
      %p38 = por %p36, %p37
      %p39 = scmp.ne.s32.totalorder %s28, %s31
      %p40 = scmp.eq.s32.totalorder %s23, 1
      %p41 = por %p39, %p40
      %p42 = scmp.ne.s32.totalorder %s31, %s32
      %p43 = scmp.eq.s32.totalorder %s23, 0
      %p44 = por %p42, %p43
      %p45 = scmp.ne.s32.totalorder %s31, %s32
      %p46 = scmp.eq.s32.totalorder %s24, 1
      %p47 = por %p45, %p46
      %p49 = scmp.ne.s32.totalorder %s32, %s48
      %p50 = scmp.eq.s32.totalorder %s24, 0
      %p51 = por %p49, %p50
      %s53 = sadd.s32 %s52, 1
      %p56 = scmp.eq.s32.totalorder %s18, 1
      %p57 = scmp.ne.s32.totalorder %s52, %s54
      %p58 = scmp.eq.s32.totalorder %s18, 0
      %p59 = por %p57, %p58
      %p60 = scmp.ne.s32.totalorder %s52, %s54
      %p61 = scmp.eq.s32.totalorder %s23, 1
      %p62 = por %p60, %p61
      %p63 = scmp.ne.s32.totalorder %s54, %s55
      %p64 = scmp.eq.s32.totalorder %s23, 0
      %p65 = por %p63, %p64
      %p66 = scmp.ne.s32.totalorder %s54, %s55
      %p67 = scmp.eq.s32.totalorder %s24, 1
      %p68 = por %p66, %p67
      %p70 = scmp.ne.s32.totalorder %s55, %s69
      %p71 = scmp.eq.s32.totalorder %s24, 0
      %p72 = por %p70, %p71
      %s74 = sadd.s32 %s73, 1
      %p77 = scmp.eq.s32.totalorder %s18, 1
      %p78 = scmp.ne.s32.totalorder %s73, %s75
      %p79 = scmp.eq.s32.totalorder %s18, 0
      %p80 = por %p78, %p79
      %p81 = scmp.ne.s32.totalorder %s73, %s75
      %p82 = scmp.eq.s32.totalorder %s23, 1
      %p83 = por %p81, %p82
      %p84 = scmp.ne.s32.totalorder %s75, %s76
      %p85 = scmp.eq.s32.totalorder %s23, 0
      %p86 = por %p84, %p85
      %p87 = scmp.ne.s32.totalorder %s75, %s76
      %p88 = scmp.eq.s32.totalorder %s24, 1
      %p89 = por %p87, %p88
      %p91 = scmp.ne.s32.totalorder %s76, %s90
      %p92 = scmp.eq.s32.totalorder %s24, 0
      %p93 = por %p91, %p92
      %s95 = sadd.s32 %s94, 1
      %p98 = scmp.eq.s32.totalorder %s18, 1
      %p99 = scmp.ne.s32.totalorder %s94, %s96
      %p100 = scmp.eq.s32.totalorder %s18, 0
      %p101 = por %p99, %p100
      %p102 = scmp.ne.s32.totalorder %s94, %s96
      %p103 = scmp.eq.s32.totalorder %s23, 1
      %p104 = por %p102, %p103
      %p105 = scmp.ne.s32.totalorder %s96, %s97
      %p106 = scmp.eq.s32.totalorder %s23, 0
      %p107 = por %p105, %p106
      %p108 = scmp.ne.s32.totalorder %s96, %s97
      %p109 = scmp.eq.s32.totalorder %s24, 1
      %p110 = por %p108, %p109
      %p112 = scmp.ne.s32.totalorder %s97, %s111
      %p113 = scmp.eq.s32.totalorder %s24, 0
      %p114 = por %p112, %p113
      %s115 = ssub.s32 %s18, %s25
      %p116 = scmp.eq.s32.totalorder %s115, 0
      %s118 = sadd.s32 %s117, 1
      %s119 = scalar_select %p116, %s117, %s118
      %p122 = pneg %p116
      %p123 = scmp.eq.s32.totalorder %s18, 1
      %p124 = por %p122, %p123
      %p125 = scmp.ne.s32.totalorder %s117, %s120
      %p126 = scmp.eq.s32.totalorder %s18, 0
      %p127 = por %p125, %p126
      %p128 = scmp.ne.s32.totalorder %s117, %s120
      %p129 = scmp.eq.s32.totalorder %s23, 1
      %p130 = por %p128, %p129
      %p131 = scmp.ne.s32.totalorder %s120, %s121
      %p132 = scmp.eq.s32.totalorder %s23, 0
      %p133 = por %p131, %p132
      %p134 = scmp.ne.s32.totalorder %s120, %s121
      %p135 = scmp.eq.s32.totalorder %s24, 1
      %p136 = por %p134, %p135
      %p138 = scmp.ne.s32.totalorder %s121, %s137
      %p139 = scmp.eq.s32.totalorder %s24, 0
      %p140 = por %p138, %p139
      %p141 = scmp.le.s32.totalorder 1, %s18
      %p142 = scmp.lt.s32.totalorder %s18, 3
      %p143 = pnand %p141, %p142
      %p144 = pneg %p143
      // Predicated region
      $region9: #{tpu_custom_call.1} parent=5 // pred_check
        _
      $region10: #{tpu_custom_call.1} parent=5 // pred_check_branch
        %146 = sbr.rel (%p143) target = $region12
      $region11: #{tpu_custom_call.1} parent=5 // pred_region
        %s147 = ssub.s32 %s18, 1
        // Predicated region
        $region13: #{tpu_custom_call.1} parent=11 // pred_check
          %p148 = pneg %p65
        $region14: #{tpu_custom_call.1} parent=11 // pred_check_branch
          %150 = sbr.rel (%p148) target = $region16
        $region15: #{tpu_custom_call.1} parent=11 // pred_region
          %s152 = ssub.s32 2048, 2048
          %153 = vsyncadd [#allocation6], %s152
          %s154 = sshll.u32 [#allocation5], 4
          %s155 = int_to_ptr.vmem [resolvable:$true] %s154
          %160 = dma.hbm_to_vmem [thread:$0]  %s1, 2048, %s155, [#allocation6], 128, 128, 8
        $region16: #{tpu_custom_call.1} parent=11 // pred_fallthru
          _
        // Predicated region
        $region17: #{tpu_custom_call.1} parent=11 // pred_check
          %p161 = pneg %p86
        $region18: #{tpu_custom_call.1} parent=11 // pred_check_branch
          %163 = sbr.rel (%p161) target = $region20
        $region19: #{tpu_custom_call.1} parent=11 // pred_region
          %s165 = ssub.s32 128, 128
          %166 = vsyncadd [#allocation6], %s165
          %s168 = sshll.u32 [#allocation7], 4
          %s169 = int_to_ptr.vmem [resolvable:$true] %s168
          %171 = dma.hbm_to_vmem [thread:$0]  %s2, 128, %s169, [#allocation6]
        $region20: #{tpu_custom_call.1} parent=11 // pred_fallthru
          _
        // Predicated region
        $region21: #{tpu_custom_call.1} parent=11 // pred_check
          %p172 = pneg %p107
        $region22: #{tpu_custom_call.1} parent=11 // pred_check_branch
          %174 = sbr.rel (%p172) target = $region24
        $region23: #{tpu_custom_call.1} parent=11 // pred_region
          %s176 = ssub.s32 128, 128
          %177 = vsyncadd [#allocation9], %s176
          %s179 = sshll.u32 [#allocation8], 4
          %s180 = int_to_ptr.vmem [resolvable:$true] %s179
          %182 = dma.hbm_to_vmem [thread:$0]  %s3, 128, %s180, [#allocation9]
        $region24: #{tpu_custom_call.1} parent=11 // pred_fallthru
          _
      $region12: #{tpu_custom_call.1} parent=5 // pred_fallthru
        _
      %p183 = scmp.lt.s32.totalorder %s18, 2
      // Predicated region
      $region25: #{tpu_custom_call.1} parent=5 // pred_check
        %p184 = pneg %p183
      $region26: #{tpu_custom_call.1} parent=5 // pred_check_branch
        %186 = sbr.rel (%p184) target = $region28
      $region27: #{tpu_custom_call.1} parent=5 // pred_region
        // Predicated region
        $region29: #{tpu_custom_call.1} parent=27 // pred_check
          %p187 = pneg %p38
        $region30: #{tpu_custom_call.1} parent=27 // pred_check_branch
          %189 = sbr.rel (%p187) target = $region32
        $region31: #{tpu_custom_call.1} parent=27 // pred_region
          %s190 = sand.u32 %s28, 1
          %s191 = scalar_lea.sflag [#allocation3], %s190
          %s192 = sand.u32 %s28, 1
          %s193 = smul.addr %s192, 192
          %s194 = scalar_lea.vmem [#allocation2], %s193
          %s196 = ssub.s32 3072, 3072
          %197 = vsyncadd %s191, %s196
          %s198 = smul.addr %s18, 24
          %s199 = smul.addr %s198, 128
          %s200 = scalar_lea.hbm %s0, %s199
          %s201 = sshll.u32 %s194, 4
          %s202 = int_to_ptr.vmem [resolvable:$true] %s201
          %207 = dma.hbm_to_vmem [thread:$0]  %s200, 3072, %s202, %s191, 128, 128, 8
        $region32: #{tpu_custom_call.1} parent=27 // pred_fallthru
          _
      $region28: #{tpu_custom_call.1} parent=5 // pred_fallthru
        _
      %p208 = scmp.le.s32.totalorder 1, %s18
      %p209 = scmp.lt.s32.totalorder %s18, 3
      %p210 = pnand %p208, %p209
      %p211 = pneg %p210
      // Predicated region
      $region33: #{tpu_custom_call.1} parent=5 // pred_check
        _
      $region34: #{tpu_custom_call.1} parent=5 // pred_check_branch
        %213 = sbr.rel (%p210) target = $region36
      $region35: #{tpu_custom_call.1} parent=5 // pred_region
        %s214 = ssub.s32 %s18, 1
        %s215 = sand.u32 %s31, 1
        %s216 = scalar_lea.sflag [#allocation3], %s215
        %s217 = sand.u32 %s31, 1
        %s218 = smul.addr %s217, 192
        %s219 = scalar_lea.vmem [#allocation2], %s218
        // Predicated region
        $region37: #{tpu_custom_call.1} parent=35 // pred_check
          %p220 = pneg %p44
        $region38: #{tpu_custom_call.1} parent=35 // pred_check_branch
          %222 = sbr.rel (%p220) target = $region40
        $region39: #{tpu_custom_call.1} parent=35 // pred_region
          %223 = dma.done %s216, 3072
        $region40: #{tpu_custom_call.1} parent=35 // pred_fallthru
          _
        // Predicated region
        $region41: #{tpu_custom_call.1} parent=35 // pred_check
          %p224 = pneg %p65
        $region42: #{tpu_custom_call.1} parent=35 // pred_check_branch
          %226 = sbr.rel (%p224) target = $region44
        $region43: #{tpu_custom_call.1} parent=35 // pred_region
          %227 = dma.done [#allocation6], 2048
        $region44: #{tpu_custom_call.1} parent=35 // pred_fallthru
          _
        // Predicated region
        $region45: #{tpu_custom_call.1} parent=35 // pred_check
          %p228 = pneg %p86
        $region46: #{tpu_custom_call.1} parent=35 // pred_check_branch
          %230 = sbr.rel (%p228) target = $region48
        $region47: #{tpu_custom_call.1} parent=35 // pred_region
          %231 = dma.done [#allocation6], 128
        $region48: #{tpu_custom_call.1} parent=35 // pred_fallthru
          _
        // Predicated region
        $region49: #{tpu_custom_call.1} parent=35 // pred_check
          %p232 = pneg %p107
        $region50: #{tpu_custom_call.1} parent=35 // pred_check_branch
          %234 = sbr.rel (%p232) target = $region52
        $region51: #{tpu_custom_call.1} parent=35 // pred_region
          %235 = dma.done [#allocation9], 128
        $region52: #{tpu_custom_call.1} parent=35 // pred_fallthru
          _
        %s236 = sand.u32 %s31, 1
        %s237 = scalar_lea.sflag [#allocation3], %s236
        %s238 = sand.u32 %s31, 1
        %s239 = smul.addr %s238, 192
        %s240 = scalar_lea.vmem [#allocation2], %s239
        %p241 = pneg %p44
        %p242 = pneg %p41
        %p243 = pneg %p65
        %p244 = pneg %p62
        %p245 = pneg %p86
        %p246 = pneg %p83
        %p247 = pneg %p107
        %p248 = pneg %p104
        %p249 = pneg %p133
        %p250 = pneg %p130
        %s251 = sand.u32 %s120, 1
        %s252 = scalar_lea.sflag [#allocation4], %s251
        %s253 = sand.u32 %s120, 1
        %s254 = smul.addr %s253, 8
        %s255 = scalar_lea.vmem [#allocation10], %s254
        %v256 = vld [vmem:[#allocation7] sm:$0xff]
        %v257 = vld [vmem:[%s219] sm:$0xff]
        %v258 = vld [vmem:[%s219 + $0x8] sm:$0xff]
        %v259 = vld [vmem:[%s219 + $0x10] sm:$0xff]
        %v260 = vld [vmem:[%s219 + $0x18] sm:$0xff]
        %v261 = vld [vmem:[%s219 + $0x20] sm:$0xff]
        %v262 = vld [vmem:[%s219 + $0x28] sm:$0xff]
        %v263 = vld [vmem:[%s219 + $0x30] sm:$0xff]
        %v264 = vld [vmem:[%s219 + $0x38] sm:$0xff]
        %v265 = vld [vmem:[%s219 + $0x40] sm:$0xff]
        %v266 = vld [vmem:[%s219 + $0x48] sm:$0xff]
        %v267 = vld [vmem:[%s219 + $0x50] sm:$0xff]
        %v268 = vld [vmem:[%s219 + $0x58] sm:$0xff]
        %v269 = vld [vmem:[%s219 + $0x60] sm:$0xff]
        %v270 = vld [vmem:[%s219 + $0x68] sm:$0xff]
        %v271 = vld [vmem:[%s219 + $0x70] sm:$0xff]
        %v272 = vld [vmem:[%s219 + $0x78] sm:$0xff]
        %v273 = vld [vmem:[%s219 + $0x80] sm:$0xff]
        %v274 = vld [vmem:[%s219 + $0x88] sm:$0xff]
        %v275 = vld [vmem:[%s219 + $0x90] sm:$0xff]
        %v276 = vld [vmem:[%s219 + $0x98] sm:$0xff]
        %v277 = vld [vmem:[%s219 + $0xa0] sm:$0xff]
        %v278 = vld [vmem:[%s219 + $0xa8] sm:$0xff]
        %v279 = vld [vmem:[%s219 + $0xb0] sm:$0xff]
        %v280 = vld [vmem:[%s219 + $0xb8] sm:$0xff]
        %v281 = vld [vmem:[#allocation5] sm:$0xff]
        %v282 = vld [vmem:[#allocation5 + $0x8] sm:$0xff]
        %v283 = vld [vmem:[#allocation5 + $0x10] sm:$0xff]
        %v284 = vld [vmem:[#allocation5 + $0x18] sm:$0xff]
        %v285 = vld [vmem:[#allocation5 + $0x20] sm:$0xff]
        %v286 = vld [vmem:[#allocation5 + $0x28] sm:$0xff]
        %v287 = vld [vmem:[#allocation5 + $0x30] sm:$0xff]
        %v288 = vld [vmem:[#allocation5 + $0x38] sm:$0xff]
        %v289 = vld [vmem:[#allocation5 + $0x40] sm:$0xff]
        %v290 = vld [vmem:[#allocation5 + $0x48] sm:$0xff]
        %v291 = vld [vmem:[#allocation5 + $0x50] sm:$0xff]
        %v292 = vld [vmem:[#allocation5 + $0x58] sm:$0xff]
        %v293 = vld [vmem:[#allocation5 + $0x60] sm:$0xff]
        %v294 = vld [vmem:[#allocation5 + $0x68] sm:$0xff]
        %v295 = vld [vmem:[#allocation5 + $0x70] sm:$0xff]
        %v296 = vld [vmem:[#allocation5 + $0x78] sm:$0xff]
        %297 = vmatprep.subr.mxu0 0.0
        %298 = vmatpush1.msra.mxu0 %v296
        %299 = vmatprep.subr.mxu0 0.0
        %300 = vmatpush1.msra.mxu0 %v295
        %301 = vmatprep.subr.mxu0 0.0
        %302 = vmatpush1.msra.mxu0 %v294
        %303 = vmatprep.subr.mxu0 0.0
        %304 = vmatpush1.msra.mxu0 %v293
        %305 = vmatprep.subr.mxu0 0.0
        %306 = vmatpush1.msra.mxu0 %v292
        %307 = vmatprep.subr.mxu0 0.0
        %308 = vmatpush1.msra.mxu0 %v291
        %309 = vmatprep.subr.mxu0 0.0
        %310 = vmatpush1.msra.mxu0 %v290
        %311 = vmatprep.subr.mxu0 0.0
        %312 = vmatpush1.msra.mxu0 %v289
        %313 = vmatprep.subr.mxu0 0.0
        %314 = vmatpush1.msra.mxu0 %v288
        %315 = vmatprep.subr.mxu0 0.0
        %316 = vmatpush1.msra.mxu0 %v287
        %317 = vmatprep.subr.mxu0 0.0
        %318 = vmatpush1.msra.mxu0 %v286
        %319 = vmatprep.subr.mxu0 0.0
        %320 = vmatpush1.msra.mxu0 %v285
        %321 = vmatprep.subr.mxu0 0.0
        %322 = vmatpush1.msra.mxu0 %v284
        %323 = vmatprep.subr.mxu0 0.0
        %324 = vmatpush1.msra.mxu0 %v283
        %325 = vmatprep.subr.mxu0 0.0
        %326 = vmatpush1.msra.mxu0 %v282
        %327 = vmatprep.subr.mxu0 0.0
        %328 = vmatpush1.msra.mxu0 %v281
        %329 = vmatprep.subr.mxu0 0.0
        %330 = vmatpush2.msra.mxu0 0.0
        %331 = vmatprep.subr.mxu0 0.0
        %332 = vmatpush2.msra.mxu0 0.0
        %333 = vmatprep.subr.mxu0 0.0
        %334 = vmatpush2.msra.mxu0 0.0
        %335 = vmatprep.subr.mxu0 0.0
        %336 = vmatpush2.msra.mxu0 0.0
        %337 = vmatprep.subr.mxu0 0.0
        %338 = vmatpush2.msra.mxu0 0.0
        %339 = vmatprep.subr.mxu0 0.0
        %340 = vmatpush2.msra.mxu0 0.0
        %341 = vmatprep.subr.mxu0 0.0
        %342 = vmatpush2.msra.mxu0 0.0
        %343 = vmatprep.subr.mxu0 0.0
        %344 = vmatpush2.msra.mxu0 0.0
        %345 = vmatprep.subr.mxu0 0.0
        %346 = vmatpush2.msra.mxu0 0.0
        %347 = vmatprep.subr.mxu0 0.0
        %348 = vmatpush2.msra.mxu0 0.0
        %349 = vmatprep.subr.mxu0 0.0
        %350 = vmatpush2.msra.mxu0 0.0
        %351 = vmatprep.subr.mxu0 0.0
        %352 = vmatpush2.msra.mxu0 0.0
        %353 = vmatprep.subr.mxu0 0.0
        %354 = vmatpush2.msra.mxu0 0.0
        %355 = vmatprep.subr.mxu0 0.0
        %356 = vmatpush2.msra.mxu0 0.0
        %357 = vmatprep.subr.mxu0 0.0
        %358 = vmatpush2.msra.mxu0 0.0
        %359 = vmatprep.subr.mxu0 0.0
        %360 = vmatpush2.msra.mxu0 0.0
        %361 = vmatprep.mubr.f32.mxu0 0.0
        %362 = vmatmul.mubr.f32.gmra.mxu0 %v257
        %v363 = vpop.f32.mrf.mxu0
        %v364 = vadd.f32 0.0, %v363
        %v365 = vpop.f32.mrf.mxu0
        %366 = vmatprep.mubr.f32.mxu0 0.0
        %367 = vmatmul.mubr.f32.gmra.mxu0 %v258
        %v368 = vpop.f32.mrf.mxu0
        %v369 = vadd.f32 0.0, %v368
        %v370 = vpop.f32.mrf.mxu0
        %371 = vmatprep.mubr.f32.mxu0 0.0
        %372 = vmatmul.mubr.f32.gmra.mxu0 %v259
        %v373 = vpop.f32.mrf.mxu0
        %v374 = vadd.f32 0.0, %v373
        %v375 = vpop.f32.mrf.mxu0
        %376 = vmatprep.mubr.f32.mxu0 0.0
        %377 = vmatmul.mubr.f32.gmra.mxu0 %v260
        %v378 = vpop.f32.mrf.mxu0
        %v379 = vadd.f32 0.0, %v378
        %v380 = vpop.f32.mrf.mxu0
        %381 = vmatprep.mubr.f32.mxu0 0.0
        %382 = vmatmul.mubr.f32.gmra.mxu0 %v261
        %v383 = vpop.f32.mrf.mxu0
        %v384 = vadd.f32 0.0, %v383
        %v385 = vpop.f32.mrf.mxu0
        %386 = vmatprep.mubr.f32.mxu0 0.0
        %387 = vmatmul.mubr.f32.gmra.mxu0 %v262
        %v388 = vpop.f32.mrf.mxu0
        %v389 = vadd.f32 0.0, %v388
        %v390 = vpop.f32.mrf.mxu0
        %391 = vmatprep.mubr.f32.mxu0 0.0
        %392 = vmatmul.mubr.f32.gmra.mxu0 %v263
        %v393 = vpop.f32.mrf.mxu0
        %v394 = vadd.f32 0.0, %v393
        %v395 = vpop.f32.mrf.mxu0
        %396 = vmatprep.mubr.f32.mxu0 0.0
        %397 = vmatmul.mubr.f32.gmra.mxu0 %v264
        %v398 = vpop.f32.mrf.mxu0
        %v399 = vadd.f32 0.0, %v398
        %v400 = vpop.f32.mrf.mxu0
        %401 = vmatprep.mubr.f32.mxu0 0.0
        %402 = vmatmul.mubr.f32.gmra.mxu0 %v265
        %v403 = vpop.f32.mrf.mxu0
        %v404 = vadd.f32 0.0, %v403
        %v405 = vpop.f32.mrf.mxu0
        %406 = vmatprep.mubr.f32.mxu0 0.0
        %407 = vmatmul.mubr.f32.gmra.mxu0 %v266
        %v408 = vpop.f32.mrf.mxu0
        %v409 = vadd.f32 0.0, %v408
        %v410 = vpop.f32.mrf.mxu0
        %411 = vmatprep.mubr.f32.mxu0 0.0
        %412 = vmatmul.mubr.f32.gmra.mxu0 %v267
        %v413 = vpop.f32.mrf.mxu0
        %v414 = vadd.f32 0.0, %v413
        %v415 = vpop.f32.mrf.mxu0
        %416 = vmatprep.mubr.f32.mxu0 0.0
        %417 = vmatmul.mubr.f32.gmra.mxu0 %v268
        %v418 = vpop.f32.mrf.mxu0
        %v419 = vadd.f32 0.0, %v418
        %v420 = vpop.f32.mrf.mxu0
        %421 = vmatprep.mubr.f32.mxu0 0.0
        %422 = vmatmul.mubr.f32.gmra.mxu0 %v269
        %v423 = vpop.f32.mrf.mxu0
        %v424 = vadd.f32 0.0, %v423
        %v425 = vpop.f32.mrf.mxu0
        %426 = vmatprep.mubr.f32.mxu0 0.0
        %427 = vmatmul.mubr.f32.gmra.mxu0 %v270
        %v428 = vpop.f32.mrf.mxu0
        %v429 = vadd.f32 0.0, %v428
        %v430 = vpop.f32.mrf.mxu0
        %431 = vmatprep.mubr.f32.mxu0 0.0
        %432 = vmatmul.mubr.f32.gmra.mxu0 %v271
        %v433 = vpop.f32.mrf.mxu0
        %v434 = vadd.f32 0.0, %v433
        %v435 = vpop.f32.mrf.mxu0
        %436 = vmatprep.mubr.f32.mxu0 0.0
        %437 = vmatmul.mubr.f32.gmra.mxu0 %v272
        %v438 = vpop.f32.mrf.mxu0
        %v439 = vadd.f32 0.0, %v438
        %v440 = vpop.f32.mrf.mxu0
        %441 = vmatprep.mubr.f32.mxu0 0.0
        %442 = vmatmul.mubr.f32.gmra.mxu0 %v273
        %v443 = vpop.f32.mrf.mxu0
        %v444 = vadd.f32 0.0, %v443
        %v445 = vpop.f32.mrf.mxu0
        %446 = vmatprep.mubr.f32.mxu0 0.0
        %447 = vmatmul.mubr.f32.gmra.mxu0 %v274
        %v448 = vpop.f32.mrf.mxu0
        %v449 = vadd.f32 0.0, %v448
        %v450 = vpop.f32.mrf.mxu0
        %451 = vmatprep.mubr.f32.mxu0 0.0
        %452 = vmatmul.mubr.f32.gmra.mxu0 %v275
        %v453 = vpop.f32.mrf.mxu0
        %v454 = vadd.f32 0.0, %v453
        %v455 = vpop.f32.mrf.mxu0
        %456 = vmatprep.mubr.f32.mxu0 0.0
        %457 = vmatmul.mubr.f32.gmra.mxu0 %v276
        %v458 = vpop.f32.mrf.mxu0
        %v459 = vadd.f32 0.0, %v458
        %v460 = vpop.f32.mrf.mxu0
        %461 = vmatprep.mubr.f32.mxu0 0.0
        %462 = vmatmul.mubr.f32.gmra.mxu0 %v277
        %v463 = vpop.f32.mrf.mxu0
        %v464 = vadd.f32 0.0, %v463
        %v465 = vpop.f32.mrf.mxu0
        %466 = vmatprep.mubr.f32.mxu0 0.0
        %467 = vmatmul.mubr.f32.gmra.mxu0 %v278
        %v468 = vpop.f32.mrf.mxu0
        %v469 = vadd.f32 0.0, %v468
        %v470 = vpop.f32.mrf.mxu0
        %471 = vmatprep.mubr.f32.mxu0 0.0
        %472 = vmatmul.mubr.f32.gmra.mxu0 %v279
        %v473 = vpop.f32.mrf.mxu0
        %v474 = vadd.f32 0.0, %v473
        %v475 = vpop.f32.mrf.mxu0
        %476 = vmatprep.mubr.f32.mxu0 0.0
        %477 = vmatmul.mubr.f32.gmra.mxu0 %v280
        %v478 = vpop.f32.mrf.mxu0
        %v479 = vadd.f32 0.0, %v478
        %v480 = vpop.f32.mrf.mxu0
        %481 = vdwg.mxu0
        %v482 = vlaneseq
        %v483 = vshrl.u32 %v482, 7
        %v484 = vsub.s32 0, %v483
        %v485 = vrot.slane %v256, %v484
        %v486 = vadd.f32 %v364, %v485
        %v487 = vadd.f32 %v369, %v485
        %v488 = vadd.f32 %v374, %v485
        %v489 = vadd.f32 %v379, %v485
        %v490 = vadd.f32 %v384, %v485
        %v491 = vadd.f32 %v389, %v485
        %v492 = vadd.f32 %v394, %v485
        %v493 = vadd.f32 %v399, %v485
        %v494 = vadd.f32 %v404, %v485
        %v495 = vadd.f32 %v409, %v485
        %v496 = vadd.f32 %v414, %v485
        %v497 = vadd.f32 %v419, %v485
        %v498 = vadd.f32 %v424, %v485
        %v499 = vadd.f32 %v429, %v485
        %v500 = vadd.f32 %v434, %v485
        %v501 = vadd.f32 %v439, %v485
        %v502 = vadd.f32 %v444, %v485
        %v503 = vadd.f32 %v449, %v485
        %v504 = vadd.f32 %v454, %v485
        %v505 = vadd.f32 %v459, %v485
        %v506 = vadd.f32 %v464, %v485
        %v507 = vadd.f32 %v469, %v485
        %v508 = vadd.f32 %v474, %v485
        %v509 = vadd.f32 %v479, %v485
        %v510 = vmax.f32 %v486, 0.0
        %v511 = vmax.f32 %v487, 0.0
        %v512 = vmax.f32 %v488, 0.0
        %v513 = vmax.f32 %v489, 0.0
        %v514 = vmax.f32 %v490, 0.0
        %v515 = vmax.f32 %v491, 0.0
        %v516 = vmax.f32 %v492, 0.0
        %v517 = vmax.f32 %v493, 0.0
        %v518 = vmax.f32 %v494, 0.0
        %v519 = vmax.f32 %v495, 0.0
        %v520 = vmax.f32 %v496, 0.0
        %v521 = vmax.f32 %v497, 0.0
        %v522 = vmax.f32 %v498, 0.0
        %v523 = vmax.f32 %v499, 0.0
        %v524 = vmax.f32 %v500, 0.0
        %v525 = vmax.f32 %v501, 0.0
        %v526 = vmax.f32 %v502, 0.0
        %v527 = vmax.f32 %v503, 0.0
        %v528 = vmax.f32 %v504, 0.0
        %v529 = vmax.f32 %v505, 0.0
        %v530 = vmax.f32 %v506, 0.0
        %v531 = vmax.f32 %v507, 0.0
        %v532 = vmax.f32 %v508, 0.0
        %v533 = vmax.f32 %v509, 0.0
        %v534 = vlaneseq
        %v535 = vshrl.u32 %v534, 7
        %v536 = vadd.s32 %v535, 8
        %v537 = vadd.s32 %v535, 16
        %v538 = vcvt.s32.f32 %v535
        %v539 = vcvt.s32.f32 %v536
        %v540 = vcvt.s32.f32 %v537
        %v541 = vlaneseq
        %v542 = vshrl.u32 %v541, 7
        %v543 = vsub.s32 2, %v542
        %v544 = vrot.slane %v256, %v543
        %vm545 = vcmp.lt.f32.partialorder %v538, %v544
        %vm546 = vcmp.lt.f32.partialorder %v539, %v544
        %vm547 = vcmp.lt.f32.partialorder %v540, %v544
        %v548 = vsel %vm545, 1, 0
        %v549 = vsel %vm546, 1, 0
        %v550 = vsel %vm547, 1, 0
        %v551 = vcvt.s32.f32 %v548
        %v552 = vcvt.s32.f32 %v549
        %v553 = vcvt.s32.f32 %v550
        %v554 = vmul.f32 %v510, %v551
        %v555 = vmul.f32 %v511, %v552
        %v556 = vmul.f32 %v512, %v553
        %v557 = vmul.f32 %v513, %v551
        %v558 = vmul.f32 %v514, %v552
        %v559 = vmul.f32 %v515, %v553
        %v560 = vmul.f32 %v516, %v551
        %v561 = vmul.f32 %v517, %v552
        %v562 = vmul.f32 %v518, %v553
        %v563 = vmul.f32 %v519, %v551
        %v564 = vmul.f32 %v520, %v552
        %v565 = vmul.f32 %v521, %v553
        %v566 = vmul.f32 %v522, %v551
        %v567 = vmul.f32 %v523, %v552
        %v568 = vmul.f32 %v524, %v553
        %v569 = vmul.f32 %v525, %v551
        %v570 = vmul.f32 %v526, %v552
        %v571 = vmul.f32 %v527, %v553
        %v572 = vmul.f32 %v528, %v551
        %v573 = vmul.f32 %v529, %v552
        %v574 = vmul.f32 %v530, %v553
        %v575 = vmul.f32 %v531, %v551
        %v576 = vmul.f32 %v532, %v552
        %v577 = vmul.f32 %v533, %v553
        %v578 = vmax.f32 %v554, %v555
        %v579 = vmax.f32 %v578, %v556
        %v580 = vrot.slane %v579, 4
        %v581 = vmax.f32 %v579, %v580
        %v582 = vrot.slane %v581, 2
        %v583 = vmax.f32 %v581, %v582
        %v584 = vrot.slane %v583, 1
        %v585 = vmax.f32 %v583, %v584
        %v586 = vmax.f32 %v557, %v558
        %v587 = vmax.f32 %v586, %v559
        %v588 = vrot.slane %v587, 4
        %v589 = vmax.f32 %v587, %v588
        %v590 = vrot.slane %v589, 2
        %v591 = vmax.f32 %v589, %v590
        %v592 = vrot.slane %v591, 1
        %v593 = vmax.f32 %v591, %v592
        %v594 = vmax.f32 %v560, %v561
        %v595 = vmax.f32 %v594, %v562
        %v596 = vrot.slane %v595, 4
        %v597 = vmax.f32 %v595, %v596
        %v598 = vrot.slane %v597, 2
        %v599 = vmax.f32 %v597, %v598
        %v600 = vrot.slane %v599, 1
        %v601 = vmax.f32 %v599, %v600
        %v602 = vmax.f32 %v563, %v564
        %v603 = vmax.f32 %v602, %v565
        %v604 = vrot.slane %v603, 4
        %v605 = vmax.f32 %v603, %v604
        %v606 = vrot.slane %v605, 2
        %v607 = vmax.f32 %v605, %v606
        %v608 = vrot.slane %v607, 1
        %v609 = vmax.f32 %v607, %v608
        %v610 = vmax.f32 %v566, %v567
        %v611 = vmax.f32 %v610, %v568
        %v612 = vrot.slane %v611, 4
        %v613 = vmax.f32 %v611, %v612
        %v614 = vrot.slane %v613, 2
        %v615 = vmax.f32 %v613, %v614
        %v616 = vrot.slane %v615, 1
        %v617 = vmax.f32 %v615, %v616
        %v618 = vmax.f32 %v569, %v570
        %v619 = vmax.f32 %v618, %v571
        %v620 = vrot.slane %v619, 4
        %v621 = vmax.f32 %v619, %v620
        %v622 = vrot.slane %v621, 2
        %v623 = vmax.f32 %v621, %v622
        %v624 = vrot.slane %v623, 1
        %v625 = vmax.f32 %v623, %v624
        %v626 = vmax.f32 %v572, %v573
        %v627 = vmax.f32 %v626, %v574
        %v628 = vrot.slane %v627, 4
        %v629 = vmax.f32 %v627, %v628
        %v630 = vrot.slane %v629, 2
        %v631 = vmax.f32 %v629, %v630
        %v632 = vrot.slane %v631, 1
        %v633 = vmax.f32 %v631, %v632
        %v634 = vmax.f32 %v575, %v576
        %v635 = vmax.f32 %v634, %v577
        %v636 = vrot.slane %v635, 4
        %v637 = vmax.f32 %v635, %v636
        %v638 = vrot.slane %v637, 2
        %v639 = vmax.f32 %v637, %v638
        %v640 = vrot.slane %v639, 1
        %v641 = vmax.f32 %v639, %v640
        %v642 = vlaneseq
        %v643 = vshrl.u32 %v642, 7
        %v644 = vsub.s32 1, %v643
        %v645 = vrot.slane %v256, %v644
        %v646 = vmul.f32 %v585, %v645
        %v647 = vmul.f32 %v593, %v645
        %v648 = vmul.f32 %v601, %v645
        %v649 = vmul.f32 %v609, %v645
        %v650 = vmul.f32 %v617, %v645
        %v651 = vmul.f32 %v625, %v645
        %v652 = vmul.f32 %v633, %v645
        %v653 = vmul.f32 %v641, %v645
        %v662 = vrot.slane %v647, 7
        %vm663 = vcmask 1041409
        %v664 = vsel %vm663, %v662, %v646
        %v665 = vrot.slane %v648, 6
        %vm666 = vcmask 1042434
        %v667 = vsel %vm666, %v665, %v664
        %v668 = vrot.slane %v649, 5
        %vm669 = vcmask 1043459
        %v670 = vsel %vm669, %v668, %v667
        %v671 = vrot.slane %v650, 4
        %vm672 = vcmask 1044484
        %v673 = vsel %vm672, %v671, %v670
        %v674 = vrot.slane %v651, 3
        %vm675 = vcmask 1045509
        %v676 = vsel %vm675, %v674, %v673
        %v677 = vrot.slane %v652, 2
        %vm678 = vcmask 1046534
        %v679 = vsel %vm678, %v677, %v676
        %v680 = vrot.slane %v653, 1
        %vm681 = vcmask 1047559
        %v682 = vsel %vm681, %v680, %v679
        %684 = vadd.xlane.f32.xlu0 %v682
        %v685 = vpop.xlane.xlu0 %684
        %v686 = vlaneseq
        %v687 = vshrl.u32 %v686, 7
        %v688 = vsub.s32 4, %v687
        %v689 = vrot.slane %v256, %v688
        %v690 = vadd.f32 %v685, %v689
        %v691 = vld [vmem:[#allocation8] sm:$0xff]
        %693 = vset.pattern.permute.xlu0 0
        %694 = vperm.xlu0 %693, %v690
        %v695 = vpop.permute.xlu0 %694
        %v697 = vmul.f32 %v695, %v691
        %v698 = vrot.slane %v697, 4
        %v699 = vadd.f32 %v697, %v698
        %v700 = vrot.slane %v699, 2
        %v701 = vadd.f32 %v699, %v700
        %v702 = vrot.slane %v701, 1
        %v703 = vadd.f32 %v701, %v702
        %v704 = vadd.f32 %v703, %v256
        %v705 = vlaneseq
        %v706 = vshrl.u32 %v705, 7
        %v707 = vsub.s32 3, %v706
        %v708 = vrot.slane %v704, %v707
        %709 = vst [vmem:[%s255] sm:$0xff] %v708
        %s710 = sand.u32 %s120, 1
        %s711 = scalar_lea.sflag [#allocation4], %s710
        %s712 = sand.u32 %s120, 1
        %s713 = smul.addr %s712, 8
        %s714 = scalar_lea.vmem [#allocation10], %s713
        // Predicated region
        $region53: #{tpu_custom_call.1} parent=35 // pred_check
          %p715 = pneg %p130
        $region54: #{tpu_custom_call.1} parent=35 // pred_check_branch
          %717 = sbr.rel (%p715) target = $region56
        $region55: #{tpu_custom_call.1} parent=35 // pred_region
          %s719 = ssub.s32 128, 128
          %720 = vsyncadd %s711, %s719
          %s721 = smul.addr %s23, 128
          %s722 = scalar_lea.hbm %s4, %s721
          %s724 = sshll.u32 %s714, 4
          %s725 = int_to_ptr.vmem [resolvable:$true] %s724
          %727 = dma.vmem_to_hbm [thread:$0]  %s725, 128, %s722, %s711
        $region56: #{tpu_custom_call.1} parent=35 // pred_fallthru
          _
      $region36: #{tpu_custom_call.1} parent=5 // pred_fallthru
        _
      %p728 = scmp.le.s32.totalorder 2, %s18
      // Predicated region
      $region57: #{tpu_custom_call.1} parent=5 // pred_check
        %p729 = pneg %p728
      $region58: #{tpu_custom_call.1} parent=5 // pred_check_branch
        %731 = sbr.rel (%p729) target = $region60
      $region59: #{tpu_custom_call.1} parent=5 // pred_region
        %s732 = ssub.s32 %s18, 2
        // Predicated region
        $region61: #{tpu_custom_call.1} parent=59 // pred_check
          %p733 = pneg %p136
        $region62: #{tpu_custom_call.1} parent=59 // pred_check_branch
          %735 = sbr.rel (%p733) target = $region64
        $region63: #{tpu_custom_call.1} parent=59 // pred_region
          %s736 = sand.u32 %s121, 1
          %s737 = scalar_lea.sflag [#allocation4], %s736
          %s738 = sand.u32 %s121, 1
          %s739 = smul.addr %s738, 8
          %s740 = scalar_lea.vmem [#allocation10], %s739
          %741 = dma.done %s737, 128
        $region64: #{tpu_custom_call.1} parent=59 // pred_fallthru
          _
      $region60: #{tpu_custom_call.1} parent=5 // pred_fallthru
        _
    $region6: #{tpu_custom_call.1} parent=1 // loop_footer
      %s22 = sadd.s32 1, %s18
    $region7: #{tpu_custom_call.1} parent=1 // loop_footer_branch
      %17 = sbr.rel target = $region3
    $region8: #{tpu_custom_call.1} parent=1 // loop_exit
      _
    %742 = vsyncpa [#allocation3], 1
    %s743 = scalar_lea.sflag [#allocation3], 1
    %744 = vsyncpa %s743, 1
    %745 = vsyncpa [#allocation6], 1
    %746 = vsyncpa [#allocation9], 1
    %747 = vsyncpa [#allocation4], 1
    %s748 = scalar_lea.sflag [#allocation4], 1
    %749 = vsyncpa %s748, 1

</llo_original>
